<compile_context>
chip_gen: v7x
topology: tpu7x:2x2x1
jax: 0.10.0
libtpu: 0.0.40
codegen_flags: <defaults>
</compile_context>

<pallas_src>
from functools import partial

import jax
import jax.numpy as jnp
from jax.experimental import pallas as pl
from jax.experimental.pallas import tpu as pltpu

# Hyperparameters: EEGEncoder(layer=3, feature_channel=32, kernel_size=32, kernel=3, dilated=True)
LAYERS = 3
CIN = 128          # EEG input channels (nn.Conv1d(128, ...))
FEAT = 32          # feature_channel
HID = 2 * FEAT     # DepthConv1d hidden channels
PROJ_K = 32        # projection kernel size
STRIDE = 8         # projection stride
KBLK = PROJ_K // STRIDE   # 4 stride-phases per projection kernel
DKERNEL = 3        # depthwise kernel
EPS = 1e-8         # GroupNorm eps


# ----------------------------------------------------------------------------------------
# One-off calibration: pin pltpu.roll's direction convention on the actual backend.
# ----------------------------------------------------------------------------------------
_ROLL_SIGN = None


def _get_roll_sign():
    """+1 if pltpu.roll matches np.roll (out[i] = in[i - shift]), else -1."""
    global _ROLL_SIGN
    if _ROLL_SIGN is None:
        def k(x_ref, o_ref):
            o_ref[...] = pltpu.roll(x_ref[...], 1, 1)

        x = jnp.broadcast_to(jnp.arange(128, dtype=jnp.float32)[None, :], (8, 128))
        out = pl.pallas_call(
            k, out_shape=jax.ShapeDtypeStruct((8, 128), jnp.float32))(x)
        v = float(out[0, 2])
        assert v in (1.0, 3.0), f"unexpected roll semantics probe value: {v}"
        _ROLL_SIGN = 1 if v == 1.0 else -1
    return _ROLL_SIGN


# ----------------------------------------------------------------------------------------
# Kernel
# ----------------------------------------------------------------------------------------
def _make_kernel(Bt, L, roll_sign):
    """Build the kernel for a given batch-fold factor Bt and frame count L."""
    LBt = L * Bt
    inv_n = 1.0 / float(HID * L)            # GroupNorm(1, HID) normalizes over (HID, L)

    def kernel(x_ref, wall_ref, colb_ref,
               c1w_ref, c1b_ref, g1g_ref, g1b_ref,
               dw_ref, db_ref, g2g_ref, g2b_ref,
               rw_ref, rb_ref, a1_ref, a2_ref,
               out_ref):
        # Lane index 0..LBt-1 (time-major, batch-minor); used for the depthwise edge masks.
        lane = jax.lax.broadcasted_iota(jnp.int32, (1, LBt), 1)
        colb = colb_ref[...] if Bt > 1 else None   # which folded sample owns each lane

        # ---- projection Conv1d(128->32, k=32, stride=8, no bias) ----
        # One MXU matmul on the phase-reshaped raw signal, then sum the KBLK shifted
        # (FEAT, LBt) windows of the small result (no wrapper-side im2col duplication).
        y = jnp.dot(wall_ref[...], x_ref[0], preferred_element_type=jnp.float32)
        out = y[0:FEAT, 0:LBt]
        for j in range(1, KBLK):
            out = out + y[j * FEAT:(j + 1) * FEAT, j * Bt:j * Bt + LBt]

        def group_norm(h, gamma, beta):
            # Channel-first stats: two full-slab sublane reductions, then per-sample masked
            # reductions on (1, LBt) rows only.  var = E[x^2] - mean^2 with a >=0 guard.
            s = jnp.sum(h, axis=0, keepdims=True)         # (1, LBt)
            s2 = jnp.sum(h * h, axis=0, keepdims=True)    # (1, LBt)
            if Bt == 1:
                mean = jnp.sum(s) * inv_n
                ex2 = jnp.sum(s2) * inv_n
                var = jnp.maximum(ex2 - mean * mean, 0.0)
                inv = jax.lax.rsqrt(var + EPS)
                return (h - mean) * inv * gamma + beta
            mean_map = jnp.zeros((1, LBt), jnp.float32)
            inv_map = jnp.zeros((1, LBt), jnp.float32)
            for b in range(Bt):                           # Bt small; tiny row ops
                sel = colb == b
                mean_b = jnp.sum(jnp.where(sel, s, 0.0)) * inv_n
                ex2_b = jnp.sum(jnp.where(sel, s2, 0.0)) * inv_n
                var_b = jnp.maximum(ex2_b - mean_b * mean_b, 0.0)
                inv_b = jax.lax.rsqrt(var_b + EPS)
                mean_map = jnp.where(sel, mean_b, mean_map)
                inv_map = jnp.where(sel, inv_b, inv_map)
            return (h - mean_map) * inv_map * gamma + beta

        for i in range(LAYERS):             # unrolled TCN stack
            d = Bt * (2 ** i)               # dilation in folded-lane units

            # ---- 1x1 conv to hidden + PReLU + GroupNorm(1, HID) ----
            h = jnp.dot(c1w_ref[i], out, preferred_element_type=jnp.float32) + c1b_ref[i]
            a1 = a1_ref[i]                  # (1, 1) channel-shared PReLU slope
            h = jnp.where(h >= 0, h, a1 * h)
            h = group_norm(h, g1g_ref[i], g1b_ref[i])

            # ---- depthwise conv, kernel=3, dilation=2**i, padding=2**i (same length) ----
            # XLU lane rolls + edge masks.  (l, b)-interleaved lane ordering makes the
            # per-sample zero padding collapse to the slab edges (lanes < d / >= LBt - d),
            # so two jnp.where's with the lane iota are exact.
            sm = d if roll_sign > 0 else LBt - d          # realizes h[:, t - d]
            sp = LBt - d if roll_sign > 0 else d          # realizes h[:, t + d]
            xm = jnp.where(lane >= d, pltpu.roll(h, sm, 1), 0.0)
            xp = jnp.where(lane < LBt - d, pltpu.roll(h, sp, 1), 0.0)
            h = dw_ref[i, 0] * xm + dw_ref[i, 1] * h + dw_ref[i, 2] * xp + db_ref[i]

            a2 = a2_ref[i]
            h = jnp.where(h >= 0, h, a2 * h)
            h = group_norm(h, g2g_ref[i], g2b_ref[i])

            # ---- residual 1x1 conv back to FEAT and add ----
            out = out + jnp.dot(rw_ref[i], h, preferred_element_type=jnp.float32) + rb_ref[i]
            # TODO(synk): DepthConv1d also computes a skip_out 1x1 conv, but
            # EEGEncoder.forward discards it, so it is intentionally not computed here.

        out_ref[0] = out

    return kernel


def _const_spec(arr):
    n = arr.ndim
    return pl.BlockSpec(arr.shape, lambda g, _n=n: (0,) * _n)


def _pick_bt(B, L):
    """Choose the batch fold Bt (a divisor of B).

    Priorities: (1) lane-dense slabs (L*Bt >= 128), (2) keep G = B/Bt >= 2 so the
    'parallel' grid axis can split across v7x's two TensorCores, (3) widen toward
    ~512 lanes to fill the 256-wide MXU N, (4) otherwise prefer more grid steps.
    """
    divisors = [d for d in range(1, B + 1) if B % d == 0]

    def score(bt):
        lanes = L * bt
        g = B // bt
        return (lanes >= 128, g >= 2, min(lanes, 512), -lanes)

    return max(divisors, key=score)


def init_params(key):
    ks = jax.random.split(key, 11)
    p = {}
    p['wproj'] = 0.05 * jax.random.normal(ks[0], (FEAT, CIN, PROJ_K), jnp.float32)
    p['c1w'] = 0.1 * jax.random.normal(ks[1], (LAYERS, HID, FEAT), jnp.float32)
    p['c1b'] = 0.05 * jax.random.normal(ks[2], (LAYERS, HID), jnp.float32)
    p['g1g'] = 1.0 + 0.1 * jax.random.normal(ks[3], (LAYERS, HID), jnp.float32)
    p['g1b'] = 0.05 * jax.random.normal(ks[4], (LAYERS, HID), jnp.float32)
    p['dw'] = 0.1 * jax.random.normal(ks[5], (LAYERS, HID, DKERNEL), jnp.float32)
    p['db'] = 0.05 * jax.random.normal(ks[6], (LAYERS, HID), jnp.float32)
    p['g2g'] = 1.0 + 0.1 * jax.random.normal(ks[7], (LAYERS, HID), jnp.float32)
    p['g2b'] = 0.05 * jax.random.normal(ks[8], (LAYERS, HID), jnp.float32)
    p['rw'] = 0.1 * jax.random.normal(ks[9], (LAYERS, FEAT, HID), jnp.float32)
    p['rb'] = 0.05 * jax.random.normal(ks[10], (LAYERS, FEAT), jnp.float32)
    p['alpha'] = 0.25 * jnp.ones((LAYERS, 2), jnp.float32)   # PyTorch PReLU default init
    return p


@partial(jax.jit, static_argnames=("input_dtype", "roll_sign"))
def _forward_jit(spike, params, input_dtype, roll_sign):
    B, cin, T = spike.shape
    L = (T - PROJ_K) // STRIDE + 1
    S = L + KBLK - 1                         # stride-phase frames actually used by the conv
    Bt = _pick_bt(B, L)                      # batch elements folded per grid step
    G = B // Bt
    LBt = L * Bt
    SBt = S * Bt
    SBt_pad = pl.cdiv(SBt, 128) * 128        # lane-align the x block / projection matmul N

    # Phase-reshape the raw signal (no im2col duplication):
    #   x[g, c*STRIDE + r, s*Bt + b] = spike[g*Bt + b, c, s*STRIDE + r]
    x = spike[:, :, :S * STRIDE].reshape(G, Bt, cin, S, STRIDE)
    x = jnp.transpose(x, (0, 2, 4, 3, 1)).reshape(G, cin * STRIDE, SBt)
    if SBt_pad > SBt:
        x = jnp.pad(x, ((0, 0), (0, 0), (0, SBt_pad - SBt)))
    x = x.astype(input_dtype)                # bf16 here halves the dominant DMA on v6e/v7x

    # Projection weight regrouped into KBLK stacked (FEAT, CIN*STRIDE) blocks:
    #   wall[j*FEAT + o, c*STRIDE + r] = wproj[o, c, j*STRIDE + r]
    wall = params['wproj'].reshape(FEAT, cin, KBLK, STRIDE)
    wall = jnp.transpose(wall, (2, 0, 1, 3)).reshape(KBLK * FEAT, cin * STRIDE)
    wall = wall.astype(input_dtype)

    # Lane-ownership map for segmented (per-sample) GroupNorm statistics.
    colb = (jnp.arange(LBt, dtype=jnp.int32) % Bt).reshape(1, LBt)

    c1b = params['c1b'][..., None]
    g1g = params['g1g'][..., None]
    g1b = params['g1b'][..., None]
    dw = jnp.transpose(params['dw'], (0, 2, 1))[..., None]   # (LAYERS, 3, HID, 1)
    db = params['db'][..., None]
    g2g = params['g2g'][..., None]
    g2b = params['g2b'][..., None]
    rb = params['rb'][..., None]
    a1s = params['alpha'][:, 0].reshape(LAYERS, 1, 1)
    a2s = params['alpha'][:, 1].reshape(LAYERS, 1, 1)

    args = (x, wall, colb, params['c1w'], c1b, g1g, g1b,
            dw, db, g2g, g2b, params['rw'], rb, a1s, a2s)

    in_specs = [pl.BlockSpec((1, cin * STRIDE, SBt_pad), lambda g: (g, 0, 0))]
    in_specs += [_const_spec(a) for a in args[1:]]

    out = pl.pallas_call(
        _make_kernel(Bt, L, roll_sign),
        out_shape=jax.ShapeDtypeStruct((G, FEAT, LBt), jnp.float32),
        grid=(G,),
        in_specs=in_specs,
        out_specs=pl.BlockSpec((1, FEAT, LBt), lambda g: (g, 0, 0)),
        compiler_params=pltpu.CompilerParams(
            dimension_semantics=("parallel",),
            vmem_limit_bytes=32 * 1024 * 1024),
    )(*args)

    # (G, FEAT, L*Bt) with (l, b)-interleaved lanes -> (B, FEAT, L)
    out = out.reshape(G, FEAT, L, Bt)
    out = jnp.transpose(out, (0, 3, 1, 2)).reshape(B, FEAT, L)
    return out


def eeg_encoder_forward(spike, params, input_dtype=jnp.float32):
    # Roll-direction probe runs eagerly (cached) so the jitted trace sees a concrete sign.
    return _forward_jit(spike, params, input_dtype=input_dtype, roll_sign=_get_roll_sign())


def eeg_encoder_reference(spike, params):
    """Pure-JAX reference mirroring the PyTorch forward exactly."""
    B, cin, T = spike.shape
    L = (T - PROJ_K) // STRIDE + 1
    idx = STRIDE * jnp.arange(L)[:, None] + jnp.arange(PROJ_K)[None, :]
    frames = spike[:, :, idx]                                               # (B, CIN, L, K)
    out = jnp.einsum('ock,bclk->bol', params['wproj'], frames,
                     precision=jax.lax.Precision.HIGHEST)
    for i in range(LAYERS):
        d = 2 ** i
        h = jnp.einsum('hc,bcl->bhl', params['c1w'][i], out,
                       precision=jax.lax.Precision.HIGHEST) + params['c1b'][i][None, :, None]
        a1 = params['alpha'][i, 0]
        h = jnp.where(h >= 0, h, a1 * h)
        mean = h.mean(axis=(1, 2), keepdims=True)
        var = ((h - mean) ** 2).mean(axis=(1, 2), keepdims=True)
        h = (h - mean) / jnp.sqrt(var + EPS)
        h = h * params['g1g'][i][None, :, None] + params['g1b'][i][None, :, None]

        hp = jnp.pad(h, ((0, 0), (0, 0), (d, d)))
        w = params['dw'][i]
        h = (w[None, :, 0, None] * hp[:, :, 0:L]
             + w[None, :, 1, None] * hp[:, :, d:d + L]
             + w[None, :, 2, None] * hp[:, :, 2 * d:2 * d + L]
             + params['db'][i][None, :, None])

        a2 = params['alpha'][i, 1]
        h = jnp.where(h >= 0, h, a2 * h)
        mean = h.mean(axis=(1, 2), keepdims=True)
        var = ((h - mean) ** 2).mean(axis=(1, 2), keepdims=True)
        h = (h - mean) / jnp.sqrt(var + EPS)
        h = h * params['g2g'][i][None, :, None] + params['g2b'][i][None, :, None]

        residual = jnp.einsum('oh,bhl->bol', params['rw'][i], h,
                              precision=jax.lax.Precision.HIGHEST) + params['rb'][i][None, :, None]
        out = out + residual
    return out


if __name__ == "__main__":
    key = jax.random.PRNGKey(0)
    kx, kp = jax.random.split(key)
    B = 4
    T = STRIDE * 127 + PROJ_K          # -> L = 128 frames; Bt=2 -> LBt=256 lanes, G=2 steps
    spike = jax.random.normal(kx, (B, CIN, T), jnp.float32)
    params = init_params(kp)

    out = eeg_encoder_forward(spike, params)
    out = jax.block_until_ready(out)

    L = (T - PROJ_K) // STRIDE + 1
    assert out.shape == (B, FEAT, L), out.shape
    assert bool(jnp.all(jnp.isfinite(out)))

    ref = eeg_encoder_reference(spike, params)
    # Kernel matmuls run at default MXU precision and GroupNorm uses the fused
    # E[x^2]-mean^2 form; reference uses Precision.HIGHEST + two-pass stats -> 2e-3 tol.
    assert bool(jnp.allclose(out, ref, atol=2e-3, rtol=2e-3)), \
        float(jnp.max(jnp.abs(out - ref)))

    # bf16-input path (halves the dominant x DMA on v6e/v7x; f32 accumulation + f32
    # elementwise math).  Loose tolerance: this is a smoke test of the reduced-DMA path.
    out_bf16 = jax.block_until_ready(
        eeg_encoder_forward(spike, params, input_dtype=jnp.bfloat16))
    assert out_bf16.shape == (B, FEAT, L)
    assert bool(jnp.all(jnp.isfinite(out_bf16)))
    assert bool(jnp.allclose(out_bf16, ref, atol=2.5e-1, rtol=5e-2)), \
        float(jnp.max(jnp.abs(out_bf16 - ref)))

    print("KERNEL_OK")
</pallas_src>

<mosaic_0001>
module attributes {stable_mosaic.version = 11 : i64} {
  func.func @k(%arg0: memref<8x128xf32, #tpu.memory_space<vmem>>, %arg1: memref<8x128xf32, #tpu.memory_space<vmem>>) attributes {dimension_semantics = [], scalar_prefetch = 0 : i64, scratch_operands = 0 : i64, tpu.core_type = #tpu.core_type<tc>} {
    %c0 = arith.constant 0 : index
    %c0_0 = arith.constant 0 : index
    %0 = vector.load %arg0[%c0, %c0_0] : memref<8x128xf32, #tpu.memory_space<vmem>>, vector<8x128xf32>
    %c1_i32 = arith.constant 1 : i32
    %1 = tpu.dynamic_rotate %0 by %c1_i32 dim 1 : vector<8x128xf32>, i32 -> vector<8x128xf32>
    %c0_1 = arith.constant 0 : index
    %c0_2 = arith.constant 0 : index
    %2 = vector.load %arg1[%c0_1, %c0_2] : memref<8x128xf32, #tpu.memory_space<vmem>>, vector<8x128xf32>
    tpu.vector_store %arg1[%c0_1, %c0_2], %1 {strides = array<i32>} : memref<8x128xf32, #tpu.memory_space<vmem>>, vector<8x128xf32>,
    return
  }
}

</mosaic_0001>

<llo_original>
// kernel: tpu_custom_call.1
$region0: #{tpu_custom_call.1}
  #allocation0 [shape = 'u32[]', space=smem, size = 0x4, offset = 0x4, fixed_abs, tag = 'smem constant byte address 0x4 - core index']
  #allocation1 [shape = 'u32[144,128]{1,0:T(1,128)}', space=vmem, size = 0x12000, scoped, tag = 'internal scratch']
  %s0 = inlined_call_operand.hbm [shape: f32[8,128], index: 0, kind: input, shape index: {}]
  %s1 = inlined_call_operand.hbm [shape: f32[8,128], index: 1, kind: output, shape index: {}]
  %s2 = sld [smem:[#allocation0]]
  $region18: #{tpu_custom_call.1} parent=0
    _
  %s4 = ssub.s32 1, %s2
  %s5 = scalar_select 0, %s4, %s2
  $region1: #{tpu_custom_call.1} parent=0
    #allocation2 [shape = 'u8[4096]{0}', space=vmem, size = 0x1000, scoped, tag = 'input window, operand 0, single buffered']
    #allocation3 [shape = 's32[1]{0}', space=sflag, size = 0x4, scoped, tag = 'scoped memory for tpu_custom_call.1']
    #allocation4 [shape = 's32[1]{0}', space=sflag, size = 0x4, scoped, tag = 'scoped memory for tpu_custom_call.1']
    #allocation5 [shape = 'u8[4096]{0}', space=vmem, size = 0x1000, scoped, tag = 'output window, operand 0, single buffered']
    %6 = vsyncpa [#allocation3], 0
    %7 = vsyncpa [#allocation4], 0
    // Predicated region
    $region2: #{tpu_custom_call.1} parent=1 // pred_check
      _
    $region3: #{tpu_custom_call.1} parent=1 // pred_check_branch
      %9 = sbr.rel (0) target = $region5
    $region4: #{tpu_custom_call.1} parent=1 // pred_region
      %s11 = ssub.s32 128, 128
      %12 = vsyncadd [#allocation3], %s11
      %s14 = sshll.u32 [#allocation2], 4
      %s15 = int_to_ptr.vmem [resolvable:$true] %s14
      %17 = dma.hbm_to_vmem [thread:$0]  %s0, 128, %s15, [#allocation3]
    $region5: #{tpu_custom_call.1} parent=1 // pred_fallthru
      _
    // Predicated region
    $region6: #{tpu_custom_call.1} parent=1 // pred_check
      _
    $region7: #{tpu_custom_call.1} parent=1 // pred_check_branch
      %19 = sbr.rel (0) target = $region9
    $region8: #{tpu_custom_call.1} parent=1 // pred_region
      %20 = dma.done [#allocation3], 128
    $region9: #{tpu_custom_call.1} parent=1 // pred_fallthru
      _
    %v21 = vld [vmem:[#allocation2] sm:$0xff]
    %22 = vrot.lane.b32.xlu0 %v21, 1
    %v23 = vpop.permute.xlu0 %22
    %24 = vst [vmem:[#allocation5] sm:$0xff] %v23
    // Predicated region
    $region10: #{tpu_custom_call.1} parent=1 // pred_check
      _
    $region11: #{tpu_custom_call.1} parent=1 // pred_check_branch
      %26 = sbr.rel (0) target = $region13
    $region12: #{tpu_custom_call.1} parent=1 // pred_region
      %s28 = ssub.s32 128, 128
      %29 = vsyncadd [#allocation4], %s28
      %s31 = sshll.u32 [#allocation5], 4
      %s32 = int_to_ptr.vmem [resolvable:$true] %s31
      %34 = dma.vmem_to_hbm [thread:$0]  %s32, 128, %s1, [#allocation4]
    $region13: #{tpu_custom_call.1} parent=1 // pred_fallthru
      _
    // Predicated region
    $region14: #{tpu_custom_call.1} parent=1 // pred_check
      _
    $region15: #{tpu_custom_call.1} parent=1 // pred_check_branch
      %36 = sbr.rel (0) target = $region17
    $region16: #{tpu_custom_call.1} parent=1 // pred_region
      %37 = dma.done [#allocation4], 128
    $region17: #{tpu_custom_call.1} parent=1 // pred_fallthru
      _
    %38 = vsyncpa [#allocation3], 1
    %39 = vsyncpa [#allocation4], 1

</llo_original>
